<compile_context>
chip_gen: v7x
topology: tpu7x:2x2x1
jax: 0.10.0
libtpu: 0.0.40
codegen_flags: <defaults>
</compile_context>

<pallas_src>
import math

import jax
import jax.numpy as jnp
from jax.experimental import pallas as pl
from jax.experimental.pallas import tpu as pltpu


# ---------------- block planning ----------------
def _round_up(x, m):
    return ((x + m - 1) // m) * m


def _largest_divisor_le(n, cap):
    cap = max(1, min(n, cap))
    for d in range(cap, 0, -1):
        if n % d == 0:
            return d
    return 1


def _plan_blocks(n, c, s, itemsize, ts_max, block_bytes):
    """Pick (TS, BN): lane-dense spatial tile and samples folded per block."""
    ts_max = max(128, (ts_max // 128) * 128)
    s128 = _round_up(s, 128)
    # keep >= 2 spatial tiles when possible so the "parallel" grid axis can be
    # sharded across v7x's two TensorCores
    n_tiles = max(2, pl.cdiv(s128, ts_max)) if s128 >= 256 else 1
    ts = _round_up(pl.cdiv(s128, n_tiles), 128)
    # cap TS so a single (1, C, TS) slab stays within the per-buffer budget
    ts_cap = max(128, (block_bytes // max(1, c * itemsize)) // 128 * 128)
    ts = max(128, min(ts, ts_max, ts_cap))
    # fold samples into the block until the budget is reached (BN must divide N
    # so the reduction grid needs no sample masking)
    bn_cap = max(1, block_bytes // (c * ts * itemsize))
    bn = _largest_divisor_le(n, bn_cap)
    return ts, bn


# ---------------- per-channel batch-statistics kernel (BatchNorm3d stats) --------
def _make_stats_kernel(ts, s_total):
    need_mask = (s_total % ts) != 0  # static (trace-time) branch

    def kernel(x_ref, stat_ref):
        # grid = (s_tiles "parallel", sample_blocks "arbitrary"); the reduction
        # axis is last and accumulates into the resident (1, 2, C) output block.
        @pl.when(pl.program_id(1) == 0)
        def _():
            stat_ref[...] = jnp.zeros_like(stat_ref)

        x = x_ref[...].astype(jnp.float32)                        # (BN, C, TS)
        if need_mask:
            # ragged spatial tail: out-of-bounds lanes read unspecified values,
            # zero them so sum / sumsq are exact.
            col = jax.lax.broadcasted_iota(jnp.int32, (1, 1, ts), 2)
            col = col + pl.program_id(0) * ts
            x = jnp.where(col < s_total, x, 0.0)
        stat_ref[0, 0:1, :] += jnp.sum(x, axis=(0, 2))[None]       # sum   (1, C)
        stat_ref[0, 1:2, :] += jnp.sum(x * x, axis=(0, 2))[None]   # sumsq (1, C)

    return kernel


def channel_stats(x_ncs, *, ts, bn, vmem_limit):
    """Per-channel (sum, sumsq) over (N, S). Returns float32 of shape (2, C)."""
    n, c, s = x_ncs.shape
    n_s = pl.cdiv(s, ts)
    partial = pl.pallas_call(
        _make_stats_kernel(ts, s),
        out_shape=jax.ShapeDtypeStruct((n_s, 2, c), jnp.float32),
        grid_spec=pltpu.PrefetchScalarGridSpec(
            num_scalar_prefetch=0,
            grid=(n_s, n // bn),  # reduction over sample blocks is the last axis
            in_specs=[pl.BlockSpec((bn, c, ts), lambda si, bi: (bi, 0, si))],
            out_specs=pl.BlockSpec((1, 2, c), lambda si, bi: (si, 0, 0)),
        ),
        compiler_params=pltpu.CompilerParams(
            dimension_semantics=("parallel", "arbitrary"),
            vmem_limit_bytes=vmem_limit),
    )(x_ncs)
    # tiny cross-tile reduction done in plain JAX
    return jnp.sum(partial, axis=0)                                # (2, C)


# ---------------- fused normalize + modulation + affine (one FMA per element) ----
def _apply_kernel(x_ref, a_ref, b_ref, o_ref):
    x = x_ref[...].astype(jnp.float32)                             # (BN, C, TS)
    o_ref[...] = (a_ref[...] * x + b_ref[...]).astype(o_ref.dtype)


def adaptive_affine_apply(x_ncs, a_nc, b_nc, *, ts, bn, vmem_limit):
    n, c, s = x_ncs.shape
    n_s = pl.cdiv(s, ts)
    a = a_nc.reshape(n, c, 1).astype(jnp.float32)
    b = b_nc.reshape(n, c, 1).astype(jnp.float32)
    return pl.pallas_call(
        _apply_kernel,
        out_shape=jax.ShapeDtypeStruct((n, c, s), x_ncs.dtype),
        grid_spec=pltpu.PrefetchScalarGridSpec(
            num_scalar_prefetch=0,
            grid=(n // bn, n_s),       # A/B blocks stay resident across s-tiles
            in_specs=[
                pl.BlockSpec((bn, c, ts), lambda bi, si: (bi, 0, si)),  # x tile
                pl.BlockSpec((bn, c, 1), lambda bi, si: (bi, 0, 0)),    # A (n,c)
                pl.BlockSpec((bn, c, 1), lambda bi, si: (bi, 0, 0)),    # B (n,c)
            ],
            out_specs=pl.BlockSpec((bn, c, ts), lambda bi, si: (bi, 0, si)),
        ),
        compiler_params=pltpu.CompilerParams(
            dimension_semantics=("parallel", "parallel"),
            vmem_limit_bytes=vmem_limit),
    )(x_ncs, a, b)


# ---------------- full forward ----------------
def adaptive_batch_norm(x, prior, w_orig, bias, eps=1e-5,
                        ts_max=8192, block_bytes=2 << 20):
    """AdaptiveBatchNorm.forward (training-mode BatchNorm3d batch statistics)."""
    n, c, d, h, w = x.shape
    s = d * h * w
    ts, bn = _plan_blocks(n, c, s, x.dtype.itemsize, ts_max, block_bytes)
    blk = bn * c * ts * x.dtype.itemsize
    # Explicit VMEM budget: ~double-buffered (in + out) blocks + temps + margin.
    # Stays well under v7x's 64 MiB physical and above v5e's 16 MiB default scope.
    vmem_limit = int(min(max(8 * blk + (4 << 20), 32 << 20), 48 << 20))

    # ---- EqualLR style projection: tiny GEMM, done directly in XLA (no kernel) ----
    y = prior.reshape(n, -1).astype(jnp.float32)          # torch.flatten(prior, 1)
    style_dim = y.shape[1]
    scale = math.sqrt(2.0 / style_dim)                    # fan_in = style_dim
    style = jnp.dot(y, (w_orig.astype(jnp.float32) * scale).T,
                    precision=jax.lax.Precision.HIGHEST) + bias.astype(jnp.float32)
    gamma, beta = style[:, :c], style[:, c:]              # (N, C) each
    y_mean = jnp.mean(y)
    y_std = jnp.std(y, ddof=1)                            # torch.std default: unbiased

    # ---- per-channel batch statistics over (N, D, H, W) ----
    x_ncs = x.reshape(n, c, s)                            # metadata-only reshape
    stats = channel_stats(x_ncs, ts=ts, bn=bn, vmem_limit=vmem_limit)
    cnt = float(n * s)
    mu = stats[0] / cnt                                   # (C,)
    var = jnp.maximum(stats[1] / cnt - mu * mu, 0.0)      # clamp: fp32 cancellation
    rstd = jax.lax.rsqrt(var + eps)                       # (C,)

    # ---- fold BN + std(y)/mean(y) modulation + gamma/beta into one per-(n,c) FMA --
    a_nc = gamma * (y_std * rstd)[None, :]                            # (N, C)
    b_nc = gamma * (y_mean - y_std * mu * rstd)[None, :] + beta       # (N, C)

    out = adaptive_affine_apply(x_ncs, a_nc, b_nc, ts=ts, bn=bn,
                                vmem_limit=vmem_limit)                # (N, C, S)
    return out.reshape(n, c, d, h, w)


# ---------------- pure-JAX reference ----------------
def _reference(x, prior, w_orig, bias, eps):
    n, c = x.shape[0], x.shape[1]
    y = prior.reshape(n, -1)
    style_dim = y.shape[1]
    style = y @ (w_orig * math.sqrt(2.0 / style_dim)).T + bias
    gamma = style[:, :c].reshape(n, c, 1, 1, 1)
    beta = style[:, c:].reshape(n, c, 1, 1, 1)
    mu = jnp.mean(x, axis=(0, 2, 3, 4), keepdims=True)
    var = jnp.var(x, axis=(0, 2, 3, 4), keepdims=True)
    norm = (x - mu) / jnp.sqrt(var + eps)
    return gamma * (jnp.std(y, ddof=1) * norm + jnp.mean(y)) + beta


if __name__ == "__main__":
    import numpy as np

    EPS = 1e-5
    key = jax.random.PRNGKey(0)

    # (name, N, C, D, H, W, style_dim, ts_max, block_bytes)
    #   small_aligned : S=256, two aligned spatial tiles, 2 samples per block
    #   ragged_tiled  : S=320, 3 tiles of 128, masked ragged tail, no pad/slice
    #   batch_blocked : tiny block budget -> BN=1, exercises the sample reduction
    #   larger        : bigger blocks (TS=1280), BN=4, 2-way parallel s-tile axis
    configs = [
        ("small_aligned", 2, 8, 4, 8, 8, 32, 8192, 2 << 20),
        ("ragged_tiled", 2, 8, 4, 8, 10, 32, 128, 2 << 20),
        ("batch_blocked", 2, 8, 4, 8, 10, 32, 128, 4096),
        ("larger", 4, 16, 8, 16, 20, 64, 8192, 2 << 20),
    ]

    for name, N, C, D, H, W, STYLE_DIM, TS_MAX, BLK_BYTES in configs:
        k1, k2, k3, key = jax.random.split(key, 4)
        x = jax.random.normal(k1, (N, C, D, H, W), dtype=jnp.float32)
        prior = jax.random.normal(k2, (N, STYLE_DIM), dtype=jnp.float32)

        # EqualLinear params: weight_orig ~ N(0,1); bias[:C] = 1, bias[C:] = 0
        w_orig = jax.random.normal(k3, (2 * C, STYLE_DIM), dtype=jnp.float32)
        bias = jnp.concatenate(
            [jnp.ones((C,), jnp.float32), jnp.zeros((C,), jnp.float32)]
        )

        out = jax.block_until_ready(
            adaptive_batch_norm(x, prior, w_orig, bias, eps=EPS,
                                ts_max=TS_MAX, block_bytes=BLK_BYTES)
        )
        ref = _reference(x, prior, w_orig, bias, EPS)

        assert out.shape == x.shape, name
        np.testing.assert_allclose(
            np.asarray(out), np.asarray(ref), rtol=1e-4, atol=1e-4, err_msg=name
        )

    print("KERNEL_OK")
</pallas_src>

<mosaic_0001>
module attributes {stable_mosaic.version = 11 : i64} {
  func.func @kernel(%arg0: i32, %arg1: i32, %arg2: memref<2x8x128xf32, #tpu.memory_space<vmem>>, %arg3: memref<1x2x8xf32, #tpu.memory_space<vmem>>) attributes {dimension_semantics = [#tpu.dimension_semantics<parallel>, #tpu.dimension_semantics<arbitrary>], iteration_bounds = array<i64: 2, 1>, scalar_prefetch = 0 : i64, scratch_operands = 0 : i64, tpu.core_type = #tpu.core_type<tc>, window_params = [{transform_indices = @transform_0, window_bounds = array<i64: 2, 8, 128>}, {transform_indices = @transform_1, window_bounds = array<i64: 1, 2, 8>}]} {
    %c0_i32 = arith.constant 0 : i32
    %0 = arith.cmpi eq, %arg1, %c0_i32 : i32
    %1 = arith.extui %0 : i1 to i32
    %c0_i32_0 = arith.constant 0 : i32
    %2 = arith.cmpi ne, %1, %c0_i32_0 : i32
    scf.if %2 {
      %cst_15 = arith.constant 0.000000e+00 : f32
      %21 = vector.broadcast %cst_15 : f32 to vector<1x2x8xf32>
      %c0_16 = arith.constant 0 : index
      %c0_17 = arith.constant 0 : index
      %c0_18 = arith.constant 0 : index
      %22 = vector.load %arg3[%c0_16, %c0_17, %c0_18] : memref<1x2x8xf32, #tpu.memory_space<vmem>>, vector<1x2x8xf32>
      tpu.vector_store %arg3[%c0_16, %c0_17, %c0_18], %21 {strides = array<i32>} : memref<1x2x8xf32, #tpu.memory_space<vmem>>, vector<1x2x8xf32>,
    } else {
    }
    %c0 = arith.constant 0 : index
    %c0_1 = arith.constant 0 : index
    %c0_2 = arith.constant 0 : index
    %3 = vector.load %arg2[%c0, %c0_1, %c0_2] : memref<2x8x128xf32, #tpu.memory_space<vmem>>, vector<2x8x128xf32>
    %c0_3 = arith.constant 0 : index
    %c0_4 = arith.constant 0 : index
    %c0_5 = arith.constant 0 : index
    %4 = vector.load %arg3[%c0_3, %c0_4, %c0_5] : memref<1x2x8xf32, #tpu.memory_space<vmem>>, vector<1x1x8xf32>
    %5 = vector.shape_cast %4 : vector<1x1x8xf32> to vector<1x8xf32>
    %cst = arith.constant dense<0.000000e+00> : vector<8xf32>
    %6 = vector.multi_reduction <add>, %3, %cst [0, 2] : vector<2x8x128xf32> to vector<8xf32>
    %7 = vector.shape_cast %6 : vector<8xf32> to vector<1x8xf32>
    %8 = arith.addf %5, %7 : vector<1x8xf32>
    %c0_6 = arith.constant 0 : index
    %c0_7 = arith.constant 0 : index
    %c0_8 = arith.constant 0 : index
    %9 = vector.load %arg3[%c0_6, %c0_7, %c0_8] : memref<1x2x8xf32, #tpu.memory_space<vmem>>, vector<1x1x8xf32>
    %10 = vector.shape_cast %9 : vector<1x1x8xf32> to vector<1x8xf32>
    %11 = vector.shape_cast %8 : vector<1x8xf32> to vector<1x1x8xf32>
    tpu.vector_store %arg3[%c0_6, %c0_7, %c0_8], %11 {strides = array<i32>} : memref<1x2x8xf32, #tpu.memory_space<vmem>>, vector<1x1x8xf32>,
    %c0_9 = arith.constant 0 : index
    %c1 = arith.constant 1 : index
    %c0_10 = arith.constant 0 : index
    %12 = vector.load %arg3[%c0_9, %c1, %c0_10] : memref<1x2x8xf32, #tpu.memory_space<vmem>>, vector<1x1x8xf32>
    %13 = vector.shape_cast %12 : vector<1x1x8xf32> to vector<1x8xf32>
    %14 = arith.mulf %3, %3 : vector<2x8x128xf32>
    %cst_11 = arith.constant dense<0.000000e+00> : vector<8xf32>
    %15 = vector.multi_reduction <add>, %14, %cst_11 [0, 2] : vector<2x8x128xf32> to vector<8xf32>
    %16 = vector.shape_cast %15 : vector<8xf32> to vector<1x8xf32>
    %17 = arith.addf %13, %16 : vector<1x8xf32>
    %c0_12 = arith.constant 0 : index
    %c1_13 = arith.constant 1 : index
    %c0_14 = arith.constant 0 : index
    %18 = vector.load %arg3[%c0_12, %c1_13, %c0_14] : memref<1x2x8xf32, #tpu.memory_space<vmem>>, vector<1x1x8xf32>
    %19 = vector.shape_cast %18 : vector<1x1x8xf32> to vector<1x8xf32>
    %20 = vector.shape_cast %17 : vector<1x8xf32> to vector<1x1x8xf32>
    tpu.vector_store %arg3[%c0_12, %c1_13, %c0_14], %20 {strides = array<i32>} : memref<1x2x8xf32, #tpu.memory_space<vmem>>, vector<1x1x8xf32>,
    return
  }
  func.func @transform_0(%arg0: i32, %arg1: i32) -> (i32, i32, i32) {
    %c0_i32 = arith.constant 0 : i32
    %c0_i32_0 = arith.constant 0 : i32
    return %arg1, %c0_i32, %arg0 : i32, i32, i32
  }
  func.func @transform_1(%arg0: i32, %arg1: i32) -> (i32, i32, i32) {
    %c0_i32 = arith.constant 0 : i32
    %c0_i32_0 = arith.constant 0 : i32
    %c0_i32_1 = arith.constant 0 : i32
    return %arg0, %c0_i32, %c0_i32_0 : i32, i32, i32
  }
}

</mosaic_0001>

<llo_original>
// kernel: tpu_custom_call.1
$region0: #{tpu_custom_call.1}
  #allocation0 [shape = 'u32[]', space=smem, size = 0x4, offset = 0x4, fixed_abs, tag = 'smem constant byte address 0x4 - core index']
  #allocation1 [shape = 'u32[144,128]{1,0:T(1,128)}', space=vmem, size = 0x12000, scoped, tag = 'internal scratch']
  %s0 = inlined_call_operand.hbm [shape: f32[2,8,256], index: 0, kind: input, shape index: {}]
  %s1 = inlined_call_operand.hbm [shape: f32[2,2,8], index: 1, kind: output, shape index: {}]
  %s2 = sld [smem:[#allocation0]]
  $region45: #{tpu_custom_call.1} parent=0
    _
  %s4 = ssub.s32 1, %s2
  %s5 = scalar_select 0, %s4, %s2
  $region1: #{tpu_custom_call.1} parent=0
    #allocation2 [shape = 'u8[16384]{0}', space=vmem, size = 0x4000, scoped, tag = 'input window, operand 0']
    #allocation3 [shape = 's32[2]{0}', space=sflag, size = 0x8, scoped, tag = 'scoped memory for tpu_custom_call.1']
    #allocation4 [shape = 's32[2]{0}', space=sflag, size = 0x8, scoped, tag = 'scoped memory for tpu_custom_call.1']
    #allocation5 [shape = 'u8[2048]{0}', space=vmem, size = 0x800, scoped, tag = 'output window, operand 0']
    %6 = vsyncpa [#allocation3], 0
    %s7 = scalar_lea.sflag [#allocation3], 1
    %8 = vsyncpa %s7, 0
    %9 = vsyncpa [#allocation4], 0
    %s10 = scalar_lea.sflag [#allocation4], 1
    %11 = vsyncpa %s10, 0
    loop: start=0, step=1, limit=4
    $region2: #{tpu_custom_call.1} parent=1 // loop_pre_header
      _
    $region3: #{tpu_custom_call.1} parent=1 // loop_header
      %s13 = sphi 0, %s17
      %p14 = scmp.ge.s32.totalorder %s13, 4
      %s20 = sphi 0, %s32
      %s21 = sphi 0, %s28
      %s22 = sphi 0, %s20
      %s23 = sphi 0, %s21
      %s24 = sphi 0, %s22
      %s25 = sphi 0, %s23
      %s37 = sphi 0, %s39
      %s40 = sphi 0, %s37
      %s41 = sphi 0, %s40
      %s57 = sphi 0, %s41
      %s63 = sphi 0, %s65
      %s66 = sphi 0, %s63
      %s67 = sphi 0, %s66
      %s83 = sphi 0, %s67
    $region4: #{tpu_custom_call.1} parent=1 // loop_header_branch
      %16 = sbr.rel (%p14) target = $region8
    $region5: #{tpu_custom_call.1} parent=1 // loop_body
      %s18 = ssub.s32 %s13, 1
      %s19 = ssub.s32 %s13, 2
      %s26 = sadd.s32 1, %s21
      %p27 = scmp.ge.s32.totalorder %s26, 1
      %s28 = scalar_select %p27, 0, %s26
      %s29 = sadd.s32 1, %s20
      %s30 = scalar_select %p27, %s29, %s20
      %p31 = scmp.ge.s32.totalorder %s30, 2
      %s32 = scalar_select %p31, 0, %s30
      %s33 = ssub.s32 %s21, %s28
      %s34 = ssub.s32 %s20, %s32
      %s35 = sor.u32 %s33, %s34
      %p36 = scmp.eq.s32.totalorder %s35, 0
      %s38 = sadd.s32 %s37, 1
      %s39 = scalar_select %p36, %s37, %s38
      %p42 = pneg %p36
      %p43 = scmp.eq.s32.totalorder %s13, 1
      %p44 = por %p42, %p43
      %p45 = scmp.ne.s32.totalorder %s37, %s40
      %p46 = scmp.eq.s32.totalorder %s13, 0
      %p47 = por %p45, %p46
      %p48 = scmp.ne.s32.totalorder %s37, %s40
      %p49 = scmp.eq.s32.totalorder %s18, 1
      %p50 = por %p48, %p49
      %p51 = scmp.ne.s32.totalorder %s40, %s41
      %p52 = scmp.eq.s32.totalorder %s18, 0
      %p53 = por %p51, %p52
      %p54 = scmp.ne.s32.totalorder %s40, %s41
      %p55 = scmp.eq.s32.totalorder %s19, 1
      %p56 = por %p54, %p55
      %p58 = scmp.ne.s32.totalorder %s41, %s57
      %p59 = scmp.eq.s32.totalorder %s19, 0
      %p60 = por %p58, %p59
      %s61 = ssub.s32 %s20, %s32
      %p62 = scmp.eq.s32.totalorder %s61, 0
      %s64 = sadd.s32 %s63, 1
      %s65 = scalar_select %p62, %s63, %s64
      %p68 = pneg %p62
      %p69 = scmp.eq.s32.totalorder %s13, 1
      %p70 = por %p68, %p69
      %p71 = scmp.ne.s32.totalorder %s63, %s66
      %p72 = scmp.eq.s32.totalorder %s13, 0
      %p73 = por %p71, %p72
      %p74 = scmp.ne.s32.totalorder %s63, %s66
      %p75 = scmp.eq.s32.totalorder %s18, 1
      %p76 = por %p74, %p75
      %p77 = scmp.ne.s32.totalorder %s66, %s67
      %p78 = scmp.eq.s32.totalorder %s18, 0
      %p79 = por %p77, %p78
      %p80 = scmp.ne.s32.totalorder %s66, %s67
      %p81 = scmp.eq.s32.totalorder %s19, 1
      %p82 = por %p80, %p81
      %p84 = scmp.ne.s32.totalorder %s67, %s83
      %p85 = scmp.eq.s32.totalorder %s19, 0
      %p86 = por %p84, %p85
      %p87 = scmp.le.s32.totalorder 1, %s13
      %p88 = scmp.lt.s32.totalorder %s13, 3
      %p89 = pnand %p87, %p88
      %p90 = pneg %p89
      // Predicated region
      $region9: #{tpu_custom_call.1} parent=5 // pred_check
        _
      $region10: #{tpu_custom_call.1} parent=5 // pred_check_branch
        %92 = sbr.rel (%p89) target = $region12
      $region11: #{tpu_custom_call.1} parent=5 // pred_region
        %s93 = ssub.s32 %s13, 1
      $region12: #{tpu_custom_call.1} parent=5 // pred_fallthru
        _
      %p94 = scmp.lt.s32.totalorder %s13, 2
      // Predicated region
      $region13: #{tpu_custom_call.1} parent=5 // pred_check
        %p95 = pneg %p94
      $region14: #{tpu_custom_call.1} parent=5 // pred_check_branch
        %97 = sbr.rel (%p95) target = $region16
      $region15: #{tpu_custom_call.1} parent=5 // pred_region
        // Predicated region
        $region17: #{tpu_custom_call.1} parent=15 // pred_check
          %p98 = pneg %p47
        $region18: #{tpu_custom_call.1} parent=15 // pred_check_branch
          %100 = sbr.rel (%p98) target = $region20
        $region19: #{tpu_custom_call.1} parent=15 // pred_region
          %s101 = sand.u32 %s37, 1
          %s102 = scalar_lea.sflag [#allocation3], %s101
          %s103 = sand.u32 %s37, 1
          %s104 = smul.addr %s103, 16
          %s105 = scalar_lea.vmem [#allocation2], %s104
          %s106 = smul.u32 2, %s21
          %s108 = ssub.s32 256, 256
          %109 = vsyncadd %s102, %s108
          %s110 = smul.addr %s106, 2
          %s111 = sadd.s32 %s20, %s110
          %s112 = smul.addr %s111, 128
          %s113 = scalar_lea.hbm %s0, %s112
          %s114 = sshll.u32 %s105, 4
          %s115 = int_to_ptr.vmem [resolvable:$true] %s114
          %120 = dma.hbm_to_vmem [thread:$0]  %s113, 256, %s115, %s102, 256, 128, 8
        $region20: #{tpu_custom_call.1} parent=15 // pred_fallthru
          _
      $region16: #{tpu_custom_call.1} parent=5 // pred_fallthru
        _
      %p121 = scmp.le.s32.totalorder 1, %s13
      %p122 = scmp.lt.s32.totalorder %s13, 3
      %p123 = pnand %p121, %p122
      %p124 = pneg %p123
      // Predicated region
      $region21: #{tpu_custom_call.1} parent=5 // pred_check
        _
      $region22: #{tpu_custom_call.1} parent=5 // pred_check_branch
        %126 = sbr.rel (%p123) target = $region24
      $region23: #{tpu_custom_call.1} parent=5 // pred_region
        %s127 = ssub.s32 %s13, 1
        %s128 = sand.u32 %s40, 1
        %s129 = scalar_lea.sflag [#allocation3], %s128
        %s130 = sand.u32 %s40, 1
        %s131 = smul.addr %s130, 16
        %s132 = scalar_lea.vmem [#allocation2], %s131
        // Predicated region
        $region25: #{tpu_custom_call.1} parent=23 // pred_check
          %p133 = pneg %p53
        $region26: #{tpu_custom_call.1} parent=23 // pred_check_branch
          %135 = sbr.rel (%p133) target = $region28
        $region27: #{tpu_custom_call.1} parent=23 // pred_region
          %136 = dma.done %s129, 256
        $region28: #{tpu_custom_call.1} parent=23 // pred_fallthru
          _
        %s137 = sand.u32 %s40, 1
        %s138 = scalar_lea.sflag [#allocation3], %s137
        %s139 = sand.u32 %s40, 1
        %s140 = smul.addr %s139, 16
        %s141 = scalar_lea.vmem [#allocation2], %s140
        %p142 = pneg %p53
        %p143 = pneg %p50
        %p144 = pneg %p79
        %p145 = pneg %p76
        %s146 = sand.u32 %s66, 1
        %s147 = scalar_lea.sflag [#allocation4], %s146
        %s148 = sand.u32 %s66, 1
        %s149 = smul.addr %s148, 2
        %s150 = scalar_lea.vmem [#allocation5], %s149
        %s151 = smul.u32 2, %s23
        %p152 = scmp.eq.s32.totalorder %s23, 0
        // Predicated region
        $region29: #{tpu_custom_call.1} parent=23 // pred_check
          %p153 = pneg %p152
        $region30: #{tpu_custom_call.1} parent=23 // pred_check_branch
          %155 = sbr.rel (%p153) target = $region32
        $region31: #{tpu_custom_call.1} parent=23 // pred_region
          %vm156 = vcmask 58368
          %157 = vst.msk [vmem:[%s150] sm:$0x3] %vm156, 0.0
        $region32: #{tpu_custom_call.1} parent=23 // pred_fallthru
          _
        %v158 = vld [vmem:[%s132] sm:$0xff]
        %v159 = vld [vmem:[%s132 + $0x8] sm:$0xff]
        %v160 = vld [vmem:[%s150] sm:$0x1]
        %v161 = vadd.f32 %v158, %v159
        %162 = vadd.xlane.f32.xlu0 %v161
        %v163 = vpop.xlane.xlu0 %162
        %v165 = vlaneseq
        %v166 = vand.u32 %v165, 127
        %v167 = vlaneseq
        %v168 = vshrl.u32 %v167, 7
        %v169 = vsub.s32 %v166, %v168
        %v170 = vrot.slane %v163, %v169
        %v172 = vadd.f32 %v160, %v170
        %vm173 = vcmask 57344
        %174 = vst.msk [vmem:[%s150] sm:$0x1] %vm173, %v172
        %v175 = vld [vmem:[%s150 + $0x1] sm:$0x1]
        %v176 = vmul.f32 %v158, %v158
        %v177 = vmul.f32 %v159, %v159
        %v178 = vadd.f32 %v176, %v177
        %179 = vadd.xlane.f32.xlu0 %v178
        %v180 = vpop.xlane.xlu0 %179
        %v182 = vlaneseq
        %v183 = vshrl.u32 %v182, 7
        %v184 = vsub.s32 %v166, %v183
        %v185 = vrot.slane %v180, %v184
        %v187 = vadd.f32 %v175, %v185
        %188 = vst.msk [vmem:[%s150 + $0x1] sm:$0x1] %vm173, %v187
        %s189 = sand.u32 %s66, 1
        %s190 = scalar_lea.sflag [#allocation4], %s189
        %s191 = sand.u32 %s66, 1
        %s192 = smul.addr %s191, 2
        %s193 = scalar_lea.vmem [#allocation5], %s192
        // Predicated region
        $region33: #{tpu_custom_call.1} parent=23 // pred_check
          %p194 = pneg %p76
        $region34: #{tpu_custom_call.1} parent=23 // pred_check_branch
          %196 = sbr.rel (%p194) target = $region36
        $region35: #{tpu_custom_call.1} parent=23 // pred_region
          %s198 = ssub.s32 32, 32
          %199 = vsyncadd %s190, %s198
          %s200 = smul.addr %s22, 32
          %s201 = scalar_lea.hbm %s1, %s200
          %s203 = sshll.u32 %s193, 4
          %s204 = int_to_ptr.vmem [resolvable:$true] %s203
          %206 = dma.vmem_to_hbm [thread:$0]  %s204, 32, %s201, %s190
        $region36: #{tpu_custom_call.1} parent=23 // pred_fallthru
          _
      $region24: #{tpu_custom_call.1} parent=5 // pred_fallthru
        _
      %p207 = scmp.le.s32.totalorder 2, %s13
      // Predicated region
      $region37: #{tpu_custom_call.1} parent=5 // pred_check
        %p208 = pneg %p207
      $region38: #{tpu_custom_call.1} parent=5 // pred_check_branch
        %210 = sbr.rel (%p208) target = $region40
      $region39: #{tpu_custom_call.1} parent=5 // pred_region
        %s211 = ssub.s32 %s13, 2
        // Predicated region
        $region41: #{tpu_custom_call.1} parent=39 // pred_check
          %p212 = pneg %p82
        $region42: #{tpu_custom_call.1} parent=39 // pred_check_branch
          %214 = sbr.rel (%p212) target = $region44
        $region43: #{tpu_custom_call.1} parent=39 // pred_region
          %s215 = sand.u32 %s67, 1
          %s216 = scalar_lea.sflag [#allocation4], %s215
          %s217 = sand.u32 %s67, 1
          %s218 = smul.addr %s217, 2
          %s219 = scalar_lea.vmem [#allocation5], %s218
          %220 = dma.done %s216, 32
        $region44: #{tpu_custom_call.1} parent=39 // pred_fallthru
          _
      $region40: #{tpu_custom_call.1} parent=5 // pred_fallthru
        _
    $region6: #{tpu_custom_call.1} parent=1 // loop_footer
      %s17 = sadd.s32 1, %s13
    $region7: #{tpu_custom_call.1} parent=1 // loop_footer_branch
      %12 = sbr.rel target = $region3
    $region8: #{tpu_custom_call.1} parent=1 // loop_exit
      _
    %221 = vsyncpa [#allocation3], 1
    %s222 = scalar_lea.sflag [#allocation3], 1
    %223 = vsyncpa %s222, 1
    %224 = vsyncpa [#allocation4], 1
    %s225 = scalar_lea.sflag [#allocation4], 1
    %226 = vsyncpa %s225, 1

</llo_original>
